<compile_context>
chip_gen: v6e
topology: v6e:2x2x1
jax: 0.10.0
libtpu: 0.0.40
codegen_flags: <defaults>
</compile_context>

<pallas_src>
import functools

import jax
import jax.numpy as jnp
from jax import lax
from jax.experimental import pallas as pl
from jax.experimental.pallas import tpu as pltpu


# --------------------------------------------------------------------------- #
# Kernels
# --------------------------------------------------------------------------- #
def _choose_last_dense_kernel(coords_ref, out_ref, *, dim: int):
    """Lane-dense tile: each 128-lane row packs (128 // dim) batch rows side by side."""
    x = coords_ref[...].astype(jnp.float32)            # (BLK, 128)
    blk, lanes = x.shape

    lane = lax.broadcasted_iota(jnp.int32, (blk, lanes), 1)
    j = lane & (dim - 1)                                # index within the D-lane group
    gid = lane - j                                      # group id (= group start lane)

    # augmented = coords + arange(D) * 1e-4
    aug = x + j.astype(jnp.float32) * jnp.float32(1e-4)

    neg = jnp.float32(-jnp.inf)
    big = jnp.int32(dim)

    # ---- segmented butterfly MAX over each aligned D-lane group --------------
    # Bidirectional doubling with validity masks obtained by rolling the group id
    # alongside the data (robust to roll direction convention; groups are aligned,
    # so masked contributions never leak across group boundaries).
    masks = []
    vmax = aug
    s = 1
    while s < dim:
        sh_a, sh_b = s, lanes - s                       # +s and -s (mod 128)
        ok_a = pltpu.roll(gid, shift=sh_a, axis=1) == gid
        ok_b = pltpu.roll(gid, shift=sh_b, axis=1) == gid
        v_a = pltpu.roll(vmax, shift=sh_a, axis=1)
        v_b = pltpu.roll(vmax, shift=sh_b, axis=1)
        vmax = jnp.maximum(vmax, jnp.where(ok_a, v_a, neg))
        vmax = jnp.maximum(vmax, jnp.where(ok_b, v_b, neg))
        masks.append((sh_a, sh_b, ok_a, ok_b))
        s *= 2

    # ---- first-occurrence tie-break (torch.argmax): segmented MIN of index ---
    cand = jnp.where(aug == vmax, j, big)
    amin = cand
    for sh_a, sh_b, ok_a, ok_b in masks:                # masks reused -> fewer rolls
        c_a = pltpu.roll(amin, shift=sh_a, axis=1)
        c_b = pltpu.roll(amin, shift=sh_b, axis=1)
        amin = jnp.minimum(amin, jnp.where(ok_a, c_a, big))
        amin = jnp.minimum(amin, jnp.where(ok_b, c_b, big))

    # one_hot(argmax).float(), written as a full-width (unmasked) lane-dense store.
    out_ref[...] = (j == amin).astype(jnp.float32)


def _choose_last_rowwise_kernel(coords_ref, out_ref):
    """Generic fallback tile (dimension does not divide 128): one batch row per vreg row."""
    x = coords_ref[...].astype(jnp.float32)             # (BLK, D)
    blk, d = x.shape
    col = lax.broadcasted_iota(jnp.int32, (blk, d), 1)
    aug = x + col.astype(jnp.float32) * jnp.float32(1e-4)
    row_max = jnp.max(aug, axis=1, keepdims=True)
    masked = jnp.where(aug == row_max, col, jnp.int32(d))
    argmax_idx = jnp.min(masked, axis=1, keepdims=True)  # first-max tie-break
    out_ref[...] = (col == argmax_idx).astype(jnp.float32)


# --------------------------------------------------------------------------- #
# Block-size selection
# --------------------------------------------------------------------------- #
def _round_up(x: int, m: int) -> int:
    return ((x + m - 1) // m) * m


def _pick_block(total_rows: int, target_rows: int):
    """Pick (block_rows, num_steps) for a 1-D grid over the row axis.

    * multiple of 8 (sublane rule) unless the block equals the full extent,
    * at least 2 grid steps when there is enough work (so the "parallel" axis
      can be split across v7x's two TensorCores),
    * capped at `target_rows` so in+out double-buffering stays well below the
      default scoped VMEM on every generation.
    """
    if total_rows <= 16:
        return total_rows, 1
    blk = min(_round_up(max(target_rows, 8), 8),
              _round_up(pl.cdiv(total_rows, 2), 8))
    blk = max(blk, 8)
    return blk, pl.cdiv(total_rows, blk)


# --------------------------------------------------------------------------- #
# Wrappers
# --------------------------------------------------------------------------- #
def _choose_last_jax(coords: jax.Array, dimension: int) -> jax.Array:
    """Pure-JAX reference / tiny-batch fallback (identical semantics)."""
    aug = coords.astype(jnp.float32) + jnp.arange(dimension, dtype=jnp.float32) * jnp.float32(1e-4)
    return jax.nn.one_hot(jnp.argmax(aug, axis=1), dimension, dtype=jnp.float32)


def _forward_lane_dense(coords: jax.Array, d: int, target_dense_rows: int) -> jax.Array:
    batch = coords.shape[0]
    rows_per_dense = 128 // d
    pad = (-batch) % rows_per_dense
    if pad:
        coords = jnp.pad(coords, ((0, pad), (0, 0)))
    padded_batch = batch + pad
    dense_rows = (padded_batch * d) // 128
    dense = coords.reshape(dense_rows, 128)             # free row-major repack

    blk, steps = _pick_block(dense_rows, target_dense_rows)
    kernel = functools.partial(_choose_last_dense_kernel, dim=d)

    out = pl.pallas_call(
        kernel,
        out_shape=jax.ShapeDtypeStruct((dense_rows, 128), jnp.float32),
        grid=(steps,),
        in_specs=[pl.BlockSpec((blk, 128), lambda i: (i, 0))],
        out_specs=pl.BlockSpec((blk, 128), lambda i: (i, 0)),
        compiler_params=pltpu.CompilerParams(
            dimension_semantics=("parallel",),           # shard steps across v7x's 2 TCs
        ),
    )(dense)

    out = out.reshape(padded_batch, d)                   # free repack back
    if pad:
        out = out[:batch]
    return out


def _forward_rowwise(coords: jax.Array, d: int, target_rows: int) -> jax.Array:
    batch = coords.shape[0]
    blk, steps = _pick_block(batch, target_rows)
    return pl.pallas_call(
        _choose_last_rowwise_kernel,
        out_shape=jax.ShapeDtypeStruct((batch, d), jnp.float32),
        grid=(steps,),
        in_specs=[pl.BlockSpec((blk, d), lambda i: (i, 0))],
        out_specs=pl.BlockSpec((blk, d), lambda i: (i, 0)),
        compiler_params=pltpu.CompilerParams(
            dimension_semantics=("parallel",),
        ),
    )(coords)


def choose_last_agent_forward(coords: jax.Array, dimension: int, *,
                              block_dense_rows: int = 2048,
                              block_rows: int = 1024,
                              jax_fallback_rows: int = 1024) -> jax.Array:
    """Pallas implementation of ChooseLastAgentModule.forward({'coords': coords}).

    coords: (batch, dimension) numeric array (any dtype; cast to f32 in-register).
    Returns (batch, dimension) float32 one-hot of argmax(coords + arange(D)*1e-4).

    block_dense_rows : rows per grid step in the lane-dense (N, 128) layout
                       (2048 -> ~1 MiB/buffer; in+out double-buffered ~4 MiB).
    block_rows       : rows per grid step for the generic (dimension ∤ 128) path.
    jax_fallback_rows: batches at or below this row count use the fused pure-JAX
                       path (skips custom-call overhead for microsecond-scale work).
                       Pass 0 to force the Pallas kernel.
    """
    batch, d = coords.shape
    assert d == dimension, (d, dimension)
    if batch == 0:
        return jnp.zeros((0, dimension), jnp.float32)
    if jax_fallback_rows and batch <= jax_fallback_rows:
        return _choose_last_jax(coords, dimension)
    if 1 <= dimension <= 128 and 128 % dimension == 0:
        return _forward_lane_dense(coords, dimension, block_dense_rows)
    # TODO(synk): dimensions that do not divide 128 keep the (correct but
    # lane-sparse) row-wise kernel; a padded lane-dense variant could cover them too.
    return _forward_rowwise(coords, dimension, block_rows)


# --------------------------------------------------------------------------- #
# Demo / self-test
# --------------------------------------------------------------------------- #
if __name__ == "__main__":
    dimension = 8
    max_num_points = 16  # noqa: F841  # unused by forward; kept for parity with __init__

    key = jax.random.PRNGKey(0)
    k1, k2, k3 = jax.random.split(key, 3)

    # Case 1: lane-dense path, single block (48 rows * 8 = 3 dense rows of 128 lanes).
    coords1 = jax.random.randint(k1, (48, dimension), 0, 7, dtype=jnp.int32)
    out1 = jax.block_until_ready(
        choose_last_agent_forward(coords1, dimension, jax_fallback_rows=0))
    ref1 = _choose_last_jax(coords1, dimension)
    assert out1.shape == (48, dimension) and out1.dtype == jnp.float32
    assert jnp.array_equal(out1, ref1)
    assert jnp.all(jnp.sum(out1, axis=1) == 1.0)

    # Case 2: lane-dense path with batch padding (1000 % 16 != 0) and a >=2-step
    # grid with a partial last block (exercises pipelining + dual-TC sharding path).
    coords2 = jax.random.randint(k2, (1000, dimension), -5, 6, dtype=jnp.int32)
    out2 = jax.block_until_ready(
        choose_last_agent_forward(coords2, dimension, jax_fallback_rows=0))
    ref2 = _choose_last_jax(coords2, dimension)
    assert out2.shape == (1000, dimension) and out2.dtype == jnp.float32
    assert jnp.array_equal(out2, ref2)
    assert jnp.all(jnp.sum(out2, axis=1) == 1.0)

    # Case 3: dimension that does not divide 128 -> generic row-wise kernel,
    # multi-step grid with a partial last block.
    dim3 = 6
    coords3 = jax.random.randint(k3, (37, dim3), 0, 4, dtype=jnp.int32)
    out3 = jax.block_until_ready(
        choose_last_agent_forward(coords3, dim3, block_rows=16, jax_fallback_rows=0))
    ref3 = _choose_last_jax(coords3, dim3)
    assert out3.shape == (37, dim3) and out3.dtype == jnp.float32
    assert jnp.array_equal(out3, ref3)
    assert jnp.all(jnp.sum(out3, axis=1) == 1.0)

    print("KERNEL_OK")
</pallas_src>

<mosaic_0001>
module attributes {stable_mosaic.version = 11 : i64} {
  func.func @_choose_last_dense_kernel(%arg0: i32, %arg1: memref<3x128xi32, #tpu.memory_space<vmem>>, %arg2: memref<3x128xf32, #tpu.memory_space<vmem>>) attributes {dimension_semantics = [#tpu.dimension_semantics<parallel>], iteration_bounds = array<i64: 1>, scalar_prefetch = 0 : i64, scratch_operands = 0 : i64, tpu.core_type = #tpu.core_type<tc>, window_params = [{transform_indices = @transform_0, window_bounds = array<i64: 3, 128>}, {transform_indices = @transform_1, window_bounds = array<i64: 3, 128>}]} {
    %c0 = arith.constant 0 : index
    %c0_0 = arith.constant 0 : index
    %0 = vector.load %arg1[%c0, %c0_0] : memref<3x128xi32, #tpu.memory_space<vmem>>, vector<3x128xi32>
    %1 = arith.sitofp %0 : vector<3x128xi32> to vector<3x128xf32>
    %2 = tpu.iota {dimensions = array<i32: 1>} : vector<3x128xi32>
    %c7_i32 = arith.constant 7 : i32
    %3 = vector.broadcast %c7_i32 : i32 to vector<3x128xi32>
    %4 = arith.andi %2, %3 : vector<3x128xi32>
    %5 = arith.subi %2, %4 : vector<3x128xi32>
    %6 = arith.sitofp %4 : vector<3x128xi32> to vector<3x128xf32>
    %cst = arith.constant 9.99999974E-5 : f32
    %7 = vector.broadcast %cst : f32 to vector<3x128xf32>
    %8 = arith.mulf %6, %7 : vector<3x128xf32>
    %9 = arith.addf %1, %8 : vector<3x128xf32>
    %c1_i32 = arith.constant 1 : i32
    %10 = tpu.dynamic_rotate %5 by %c1_i32 dim 1 : vector<3x128xi32>, i32 -> vector<3x128xi32>
    %11 = arith.cmpi eq, %10, %5 : vector<3x128xi32>
    %c127_i32 = arith.constant 127 : i32
    %12 = tpu.dynamic_rotate %5 by %c127_i32 dim 1 : vector<3x128xi32>, i32 -> vector<3x128xi32>
    %13 = arith.cmpi eq, %12, %5 : vector<3x128xi32>
    %c1_i32_1 = arith.constant 1 : i32
    %14 = tpu.dynamic_rotate %9 by %c1_i32_1 dim 1 : vector<3x128xf32>, i32 -> vector<3x128xf32>
    %c127_i32_2 = arith.constant 127 : i32
    %15 = tpu.dynamic_rotate %9 by %c127_i32_2 dim 1 : vector<3x128xf32>, i32 -> vector<3x128xf32>
    %cst_3 = arith.constant 0xFF800000 : f32
    %16 = vector.broadcast %cst_3 : f32 to vector<3x128xf32>
    %17 = arith.select %11, %14, %16 : vector<3x128xi1>, vector<3x128xf32>
    %18 = arith.maximumf %9, %17 : vector<3x128xf32>
    %cst_4 = arith.constant 0xFF800000 : f32
    %19 = vector.broadcast %cst_4 : f32 to vector<3x128xf32>
    %20 = arith.select %13, %15, %19 : vector<3x128xi1>, vector<3x128xf32>
    %21 = arith.maximumf %18, %20 : vector<3x128xf32>
    %c2_i32 = arith.constant 2 : i32
    %22 = tpu.dynamic_rotate %5 by %c2_i32 dim 1 : vector<3x128xi32>, i32 -> vector<3x128xi32>
    %23 = arith.cmpi eq, %22, %5 : vector<3x128xi32>
    %c126_i32 = arith.constant 126 : i32
    %24 = tpu.dynamic_rotate %5 by %c126_i32 dim 1 : vector<3x128xi32>, i32 -> vector<3x128xi32>
    %25 = arith.cmpi eq, %24, %5 : vector<3x128xi32>
    %c2_i32_5 = arith.constant 2 : i32
    %26 = tpu.dynamic_rotate %21 by %c2_i32_5 dim 1 : vector<3x128xf32>, i32 -> vector<3x128xf32>
    %c126_i32_6 = arith.constant 126 : i32
    %27 = tpu.dynamic_rotate %21 by %c126_i32_6 dim 1 : vector<3x128xf32>, i32 -> vector<3x128xf32>
    %cst_7 = arith.constant 0xFF800000 : f32
    %28 = vector.broadcast %cst_7 : f32 to vector<3x128xf32>
    %29 = arith.select %23, %26, %28 : vector<3x128xi1>, vector<3x128xf32>
    %30 = arith.maximumf %21, %29 : vector<3x128xf32>
    %cst_8 = arith.constant 0xFF800000 : f32
    %31 = vector.broadcast %cst_8 : f32 to vector<3x128xf32>
    %32 = arith.select %25, %27, %31 : vector<3x128xi1>, vector<3x128xf32>
    %33 = arith.maximumf %30, %32 : vector<3x128xf32>
    %c4_i32 = arith.constant 4 : i32
    %34 = tpu.dynamic_rotate %5 by %c4_i32 dim 1 : vector<3x128xi32>, i32 -> vector<3x128xi32>
    %35 = arith.cmpi eq, %34, %5 : vector<3x128xi32>
    %c124_i32 = arith.constant 124 : i32
    %36 = tpu.dynamic_rotate %5 by %c124_i32 dim 1 : vector<3x128xi32>, i32 -> vector<3x128xi32>
    %37 = arith.cmpi eq, %36, %5 : vector<3x128xi32>
    %c4_i32_9 = arith.constant 4 : i32
    %38 = tpu.dynamic_rotate %33 by %c4_i32_9 dim 1 : vector<3x128xf32>, i32 -> vector<3x128xf32>
    %c124_i32_10 = arith.constant 124 : i32
    %39 = tpu.dynamic_rotate %33 by %c124_i32_10 dim 1 : vector<3x128xf32>, i32 -> vector<3x128xf32>
    %cst_11 = arith.constant 0xFF800000 : f32
    %40 = vector.broadcast %cst_11 : f32 to vector<3x128xf32>
    %41 = arith.select %35, %38, %40 : vector<3x128xi1>, vector<3x128xf32>
    %42 = arith.maximumf %33, %41 : vector<3x128xf32>
    %cst_12 = arith.constant 0xFF800000 : f32
    %43 = vector.broadcast %cst_12 : f32 to vector<3x128xf32>
    %44 = arith.select %37, %39, %43 : vector<3x128xi1>, vector<3x128xf32>
    %45 = arith.maximumf %42, %44 : vector<3x128xf32>
    %46 = arith.cmpf oeq, %9, %45 : vector<3x128xf32>
    %c8_i32 = arith.constant 8 : i32
    %47 = vector.broadcast %c8_i32 : i32 to vector<3x128xi32>
    %48 = arith.select %46, %4, %47 : vector<3x128xi1>, vector<3x128xi32>
    %c1_i32_13 = arith.constant 1 : i32
    %49 = tpu.dynamic_rotate %48 by %c1_i32_13 dim 1 : vector<3x128xi32>, i32 -> vector<3x128xi32>
    %c127_i32_14 = arith.constant 127 : i32
    %50 = tpu.dynamic_rotate %48 by %c127_i32_14 dim 1 : vector<3x128xi32>, i32 -> vector<3x128xi32>
    %c8_i32_15 = arith.constant 8 : i32
    %51 = vector.broadcast %c8_i32_15 : i32 to vector<3x128xi32>
    %52 = arith.select %11, %49, %51 : vector<3x128xi1>, vector<3x128xi32>
    %53 = arith.minsi %48, %52 : vector<3x128xi32>
    %c8_i32_16 = arith.constant 8 : i32
    %54 = vector.broadcast %c8_i32_16 : i32 to vector<3x128xi32>
    %55 = arith.select %13, %50, %54 : vector<3x128xi1>, vector<3x128xi32>
    %56 = arith.minsi %53, %55 : vector<3x128xi32>
    %c2_i32_17 = arith.constant 2 : i32
    %57 = tpu.dynamic_rotate %56 by %c2_i32_17 dim 1 : vector<3x128xi32>, i32 -> vector<3x128xi32>
    %c126_i32_18 = arith.constant 126 : i32
    %58 = tpu.dynamic_rotate %56 by %c126_i32_18 dim 1 : vector<3x128xi32>, i32 -> vector<3x128xi32>
    %c8_i32_19 = arith.constant 8 : i32
    %59 = vector.broadcast %c8_i32_19 : i32 to vector<3x128xi32>
    %60 = arith.select %23, %57, %59 : vector<3x128xi1>, vector<3x128xi32>
    %61 = arith.minsi %56, %60 : vector<3x128xi32>
    %c8_i32_20 = arith.constant 8 : i32
    %62 = vector.broadcast %c8_i32_20 : i32 to vector<3x128xi32>
    %63 = arith.select %25, %58, %62 : vector<3x128xi1>, vector<3x128xi32>
    %64 = arith.minsi %61, %63 : vector<3x128xi32>
    %c4_i32_21 = arith.constant 4 : i32
    %65 = tpu.dynamic_rotate %64 by %c4_i32_21 dim 1 : vector<3x128xi32>, i32 -> vector<3x128xi32>
    %c124_i32_22 = arith.constant 124 : i32
    %66 = tpu.dynamic_rotate %64 by %c124_i32_22 dim 1 : vector<3x128xi32>, i32 -> vector<3x128xi32>
    %c8_i32_23 = arith.constant 8 : i32
    %67 = vector.broadcast %c8_i32_23 : i32 to vector<3x128xi32>
    %68 = arith.select %35, %65, %67 : vector<3x128xi1>, vector<3x128xi32>
    %69 = arith.minsi %64, %68 : vector<3x128xi32>
    %c8_i32_24 = arith.constant 8 : i32
    %70 = vector.broadcast %c8_i32_24 : i32 to vector<3x128xi32>
    %71 = arith.select %37, %66, %70 : vector<3x128xi1>, vector<3x128xi32>
    %72 = arith.minsi %69, %71 : vector<3x128xi32>
    %73 = arith.cmpi eq, %4, %72 : vector<3x128xi32>
    %74 = arith.extui %73 : vector<3x128xi1> to vector<3x128xi32>
    %75 = arith.sitofp %74 : vector<3x128xi32> to vector<3x128xf32>
    %c0_25 = arith.constant 0 : index
    %c0_26 = arith.constant 0 : index
    %76 = vector.load %arg2[%c0_25, %c0_26] : memref<3x128xf32, #tpu.memory_space<vmem>>, vector<3x128xf32>
    tpu.vector_store %arg2[%c0_25, %c0_26], %75 {strides = array<i32>} : memref<3x128xf32, #tpu.memory_space<vmem>>, vector<3x128xf32>,
    return
  }
  func.func @transform_0(%arg0: i32) -> (i32, i32) {
    %c0_i32 = arith.constant 0 : i32
    %c0_i32_0 = arith.constant 0 : i32
    return %arg0, %c0_i32 : i32, i32
  }
  func.func @transform_1(%arg0: i32) -> (i32, i32) {
    %c0_i32 = arith.constant 0 : i32
    %c0_i32_0 = arith.constant 0 : i32
    return %arg0, %c0_i32 : i32, i32
  }
}

</mosaic_0001>

<llo_original>
// kernel: tpu_custom_call.1
$region0: #{tpu_custom_call.1}
  #allocation0 [shape = 'u32[]', space=smem, size = 0x4, offset = 0x4, fixed_abs, tag = 'smem constant byte address 0x4 - core index']
  #allocation1 [shape = 'u32[144,128]{1,0:T(1,128)}', space=vmem, size = 0x12000, scoped, tag = 'internal scratch']
  %s0 = inlined_call_operand.hbm [shape: s32[3,128], index: 0, kind: input, shape index: {}]
  %s1 = inlined_call_operand.hbm [shape: f32[3,128], index: 1, kind: output, shape index: {}]
  %s2 = sld [smem:[#allocation0]]
  $region18: #{tpu_custom_call.1} parent=0
    _
  %s4 = ssub.s32 1, %s2
  %s5 = scalar_select 0, %s4, %s2
  $region1: #{tpu_custom_call.1} parent=0
    #allocation2 [shape = 'u8[2048]{0}', space=vmem, size = 0x800, scoped, tag = 'input window, operand 0, single buffered']
    #allocation3 [shape = 's32[1]{0}', space=sflag, size = 0x4, scoped, tag = 'scoped memory for tpu_custom_call.1']
    #allocation4 [shape = 's32[1]{0}', space=sflag, size = 0x4, scoped, tag = 'scoped memory for tpu_custom_call.1']
    #allocation5 [shape = 'u8[2048]{0}', space=vmem, size = 0x800, scoped, tag = 'output window, operand 0, single buffered']
    %6 = vsyncpa [#allocation3], 0
    %7 = vsyncpa [#allocation4], 0
    // Predicated region
    $region2: #{tpu_custom_call.1} parent=1 // pred_check
      _
    $region3: #{tpu_custom_call.1} parent=1 // pred_check_branch
      %9 = sbr.rel (0) target = $region5
    $region4: #{tpu_custom_call.1} parent=1 // pred_region
      %s11 = ssub.s32 64, 64
      %12 = vsyncadd [#allocation3], %s11
      %s14 = sshll.u32 [#allocation2], 4
      %s15 = int_to_ptr.vmem [resolvable:$true] %s14
      %17 = dma.hbm_to_vmem [thread:$0]  %s0, 64, %s15, [#allocation3]
    $region5: #{tpu_custom_call.1} parent=1 // pred_fallthru
      _
    // Predicated region
    $region6: #{tpu_custom_call.1} parent=1 // pred_check
      _
    $region7: #{tpu_custom_call.1} parent=1 // pred_check_branch
      %19 = sbr.rel (0) target = $region9
    $region8: #{tpu_custom_call.1} parent=1 // pred_region
      %20 = dma.done [#allocation3], 64
    $region9: #{tpu_custom_call.1} parent=1 // pred_fallthru
      _
    %v21 = vld [vmem:[#allocation2] sm:$0x7]
    %v22 = vcvt.s32.f32 %v21
    %v23 = vlaneseq
    %v24 = vand.u32 %v23, 127
    %v25 = vand.u32 %v24, 7
    %v26 = vsub.s32 %v24, %v25
    %v27 = vcvt.s32.f32 %v25
    %v28 = vmul.f32 %v27, 0.0001
    %v29 = vadd.f32 %v22, %v28
    %30 = vrot.lane.b32.xlu0 %v26, 1
    %v31 = vpop.permute.xlu0 %30
    %vm32 = vcmp.eq.s32.totalorder %v31, %v26
    %33 = vrot.lane.b32.xlu0 %v26, 127
    %v34 = vpop.permute.xlu0 %33
    %vm35 = vcmp.eq.s32.totalorder %v34, %v26
    %36 = vrot.lane.b32.xlu0 %v29, 1
    %v37 = vpop.permute.xlu0 %36
    %38 = vrot.lane.b32.xlu0 %v29, 127
    %v39 = vpop.permute.xlu0 %38
    %v40 = vsel %vm32, %v37, -inf
    %v41 = vmax.f32 %v29, %v40
    %v42 = vsel %vm35, %v39, -inf
    %v43 = vmax.f32 %v41, %v42
    %44 = vrot.lane.b32.xlu0 %v26, 2
    %v45 = vpop.permute.xlu0 %44
    %vm46 = vcmp.eq.s32.totalorder %v45, %v26
    %47 = vrot.lane.b32.xlu0 %v26, 126
    %v48 = vpop.permute.xlu0 %47
    %vm49 = vcmp.eq.s32.totalorder %v48, %v26
    %50 = vrot.lane.b32.xlu0 %v43, 2
    %v51 = vpop.permute.xlu0 %50
    %52 = vrot.lane.b32.xlu0 %v43, 126
    %v53 = vpop.permute.xlu0 %52
    %v54 = vsel %vm46, %v51, -inf
    %v55 = vmax.f32 %v43, %v54
    %v56 = vsel %vm49, %v53, -inf
    %v57 = vmax.f32 %v55, %v56
    %58 = vrot.lane.b32.xlu0 %v26, 4
    %v59 = vpop.permute.xlu0 %58
    %vm60 = vcmp.eq.s32.totalorder %v59, %v26
    %61 = vrot.lane.b32.xlu0 %v26, 124
    %v62 = vpop.permute.xlu0 %61
    %vm63 = vcmp.eq.s32.totalorder %v62, %v26
    %64 = vrot.lane.b32.xlu0 %v57, 4
    %v65 = vpop.permute.xlu0 %64
    %66 = vrot.lane.b32.xlu0 %v57, 124
    %v67 = vpop.permute.xlu0 %66
    %v68 = vsel %vm60, %v65, -inf
    %v69 = vmax.f32 %v57, %v68
    %v70 = vsel %vm63, %v67, -inf
    %v71 = vmax.f32 %v69, %v70
    %vm72 = vcmp.eq.f32.partialorder %v29, %v71
    %v73 = vsel %vm72, %v25, 8
    %74 = vrot.lane.b32.xlu0 %v73, 1
    %v75 = vpop.permute.xlu0 %74
    %76 = vrot.lane.b32.xlu0 %v73, 127
    %v77 = vpop.permute.xlu0 %76
    %v78 = vsel %vm32, %v75, 8
    %vm79 = vcmp.lt.s32.totalorder %v73, %v78
    %v80 = vsel %vm79, %v73, %v78
    %v81 = vsel %vm35, %v77, 8
    %vm82 = vcmp.lt.s32.totalorder %v80, %v81
    %v83 = vsel %vm82, %v80, %v81
    %84 = vrot.lane.b32.xlu0 %v83, 2
    %v85 = vpop.permute.xlu0 %84
    %86 = vrot.lane.b32.xlu0 %v83, 126
    %v87 = vpop.permute.xlu0 %86
    %v88 = vsel %vm46, %v85, 8
    %vm89 = vcmp.lt.s32.totalorder %v83, %v88
    %v90 = vsel %vm89, %v83, %v88
    %v91 = vsel %vm49, %v87, 8
    %vm92 = vcmp.lt.s32.totalorder %v90, %v91
    %v93 = vsel %vm92, %v90, %v91
    %94 = vrot.lane.b32.xlu0 %v93, 4
    %v95 = vpop.permute.xlu0 %94
    %96 = vrot.lane.b32.xlu0 %v93, 124
    %v97 = vpop.permute.xlu0 %96
    %v98 = vsel %vm60, %v95, 8
    %vm99 = vcmp.lt.s32.totalorder %v93, %v98
    %v100 = vsel %vm99, %v93, %v98
    %v101 = vsel %vm63, %v97, 8
    %vm102 = vcmp.lt.s32.totalorder %v100, %v101
    %v103 = vsel %vm102, %v100, %v101
    %vm104 = vcmp.eq.s32.totalorder %v25, %v103
    %v105 = vsel %vm104, 1, 0
    %v106 = vcvt.s32.f32 %v105
    %107 = vst [vmem:[#allocation5] sm:$0x7] %v106
    // Predicated region
    $region10: #{tpu_custom_call.1} parent=1 // pred_check
      _
    $region11: #{tpu_custom_call.1} parent=1 // pred_check_branch
      %109 = sbr.rel (0) target = $region13
    $region12: #{tpu_custom_call.1} parent=1 // pred_region
      %s111 = ssub.s32 64, 64
      %112 = vsyncadd [#allocation4], %s111
      %s114 = sshll.u32 [#allocation5], 4
      %s115 = int_to_ptr.vmem [resolvable:$true] %s114
      %117 = dma.vmem_to_hbm [thread:$0]  %s115, 64, %s1, [#allocation4]
    $region13: #{tpu_custom_call.1} parent=1 // pred_fallthru
      _
    // Predicated region
    $region14: #{tpu_custom_call.1} parent=1 // pred_check
      _
    $region15: #{tpu_custom_call.1} parent=1 // pred_check_branch
      %119 = sbr.rel (0) target = $region17
    $region16: #{tpu_custom_call.1} parent=1 // pred_region
      %120 = dma.done [#allocation4], 64
    $region17: #{tpu_custom_call.1} parent=1 // pred_fallthru
      _
    %121 = vsyncpa [#allocation3], 1
    %122 = vsyncpa [#allocation4], 1

</llo_original>
